<compile_context>
chip_gen: v6e
topology: v6e:2x2x1
jax: 0.10.0
libtpu: 0.0.40
codegen_flags: <defaults>
</compile_context>

<pallas_src>
import functools

import jax
import jax.numpy as jnp
import numpy as np
from jax.experimental import pallas as pl
from jax.experimental.pallas import tpu as pltpu

_NEG_INF = -1e30  # finite "minus infinity": avoids NaN on fully-masked rows


def _sdpa_kernel(*refs, scale, has_mask, has_prev, return_scores):
    idx = 0
    q_ref = refs[idx]; idx += 1
    k_ref = refs[idx]; idx += 1
    v_ref = refs[idx]; idx += 1
    mask_ref = prev_ref = None
    if has_mask:
        mask_ref = refs[idx]; idx += 1
    if has_prev:
        prev_ref = refs[idx]; idx += 1
    ctx_ref = refs[idx]; idx += 1
    attn_ref = refs[idx]; idx += 1
    scores_ref = None
    if return_scores:
        scores_ref = refs[idx]; idx += 1

    q = q_ref[...]                      # (TB, TQ, Dk)  native dtype
    k = k_ref[...]                      # (TB, Dk, Lk)
    v = v_ref[...]                      # (TB, Lk, Dv)

    # Fold 1/sqrt(d_k) into q: O(TQ*Dk) elementwise work instead of O(TQ*Lk).
    qs = q * jnp.asarray(scale, q.dtype)

    # scores via the MXU in the inputs' native dtype, accumulated in f32.
    scores = jnp.einsum("bqd,bdk->bqk", qs, k,
                        preferred_element_type=jnp.float32)   # (TB, TQ, Lk)

    if has_mask:
        scores = scores + mask_ref[...].astype(jnp.float32)
    if has_prev:
        scores = scores + prev_ref[...].astype(jnp.float32)

    # One-pass softmax over the (full) Lk axis, in f32.
    smax = jnp.max(scores, axis=-1, keepdims=True)
    e = jnp.exp(scores - smax)
    denom = jnp.sum(e, axis=-1, keepdims=True)
    inv = pl.reciprocal(denom, approx=True)        # EUP vrcp; VALU stays free
    inv = inv * (2.0 - denom * inv)                # 1 NR step on (TB,TQ,1): ~exact
    attn = e * inv

    ctx = jnp.einsum("bqk,bkd->bqd", attn.astype(v.dtype), v,
                     preferred_element_type=jnp.float32)      # (TB, TQ, Dv)

    attn_ref[...] = attn.astype(attn_ref.dtype)
    ctx_ref[...] = ctx.astype(ctx_ref.dtype)
    if return_scores:
        scores_ref[...] = scores.astype(scores_ref.dtype)


def _choose_tiles(BH, Lq, Lk, Dk, Dv, in_isz, out_isz, extra_iszs, return_scores):
    """Pick (heads-per-step TB, Lq tile TQ) under a double-buffered VMEM budget."""
    budget = 24 * 1024 * 1024  # leaves headroom even on v7x (64 MiB physical VMEM)
    n_lk_outs = 2 if return_scores else 1

    def step_bytes(tb, tq):
        b = tb * (tq * Dk + Dk * Lk + Lk * Dv) * in_isz            # q, k, v tiles
        b += sum(tb * tq * Lk * isz for isz in extra_iszs)         # mask / prev
        b += tb * tq * (Dv + n_lk_outs * Lk) * out_isz             # ctx, attn(, scores)
        b *= 2                                                     # double-buffering
        b += tb * tq * Lk * 4                                      # f32 scores/probs
        return b

    # Batch heads per grid step when the per-head problem is small.
    tb = 1
    if Lq * Lk <= 128 * 256:
        for cand in range(min(BH, 64), 0, -1):
            if BH % cand == 0 and step_bytes(cand, Lq) <= budget:
                tb = cand
                break

    # Tile Lq: largest divisor (multiple of 8, <= 512) that fits the budget.
    tq = Lq
    if step_bytes(tb, tq) > budget:
        start = min(Lq - Lq % 8, 512)
        for cand in range(start, 7, -8):
            if Lq % cand == 0 and step_bytes(tb, cand) <= budget:
                tq = cand
                break

    return tb, tq, step_bytes(tb, tq)


def scaled_dot_product_attention(q, k, v, d_k, prev=None, attn_mask=None,
                                 out_dtype=None, return_scores=False):
    """q: [BH, Lq, Dk], k: [BH, Dk, Lk], v: [BH, Lk, Dv]."""
    BH, Lq, Dk = q.shape
    _, _, Lk = k.shape
    _, _, Dv = v.shape
    out_dtype = q.dtype if out_dtype is None else np.dtype(out_dtype)

    if attn_mask is not None:
        attn_mask = jnp.broadcast_to(attn_mask, (BH, Lq, Lk))
        if attn_mask.dtype == jnp.bool_:
            # Additive finite bias: identical to masked_fill(-inf) for any row
            # with at least one unmasked key, and NaN-free otherwise.
            attn_mask = jnp.where(attn_mask, _NEG_INF, 0.0).astype(q.dtype)
    if prev is not None:
        prev = jnp.broadcast_to(prev, (BH, Lq, Lk))

    has_mask = attn_mask is not None
    has_prev = prev is not None

    extra_iszs = []
    if has_mask:
        extra_iszs.append(attn_mask.dtype.itemsize)
    if has_prev:
        extra_iszs.append(prev.dtype.itemsize)

    tb, tq, step_vmem = _choose_tiles(
        BH, Lq, Lk, Dk, Dv,
        in_isz=q.dtype.itemsize,
        out_isz=np.dtype(out_dtype).itemsize,
        extra_iszs=extra_iszs,
        return_scores=return_scores,
    )
    grid = (BH // tb, Lq // tq)

    in_specs = [
        pl.BlockSpec((tb, tq, Dk), lambda b, i: (b, i, 0)),
        pl.BlockSpec((tb, Dk, Lk), lambda b, i: (b, 0, 0)),
        pl.BlockSpec((tb, Lk, Dv), lambda b, i: (b, 0, 0)),
    ]
    args = [q, k, v]
    if has_mask:
        in_specs.append(pl.BlockSpec((tb, tq, Lk), lambda b, i: (b, i, 0)))
        args.append(attn_mask)
    if has_prev:
        in_specs.append(pl.BlockSpec((tb, tq, Lk), lambda b, i: (b, i, 0)))
        args.append(prev)

    out_specs = [
        pl.BlockSpec((tb, tq, Dv), lambda b, i: (b, i, 0)),
        pl.BlockSpec((tb, tq, Lk), lambda b, i: (b, i, 0)),
    ]
    out_shape = [
        jax.ShapeDtypeStruct((BH, Lq, Dv), out_dtype),
        jax.ShapeDtypeStruct((BH, Lq, Lk), out_dtype),
    ]
    if return_scores:
        out_specs.append(pl.BlockSpec((tb, tq, Lk), lambda b, i: (b, i, 0)))
        out_shape.append(jax.ShapeDtypeStruct((BH, Lq, Lk), jnp.float32))

    kernel = functools.partial(
        _sdpa_kernel,
        scale=1.0 / (float(d_k) ** 0.5),
        has_mask=has_mask,
        has_prev=has_prev,
        return_scores=return_scores,
    )

    # Only raise the scoped-VMEM limit above the (safe) default when the tiles
    # actually need it; cap well below v7x's 64 MiB physical VMEM.
    compiler_kwargs = dict(dimension_semantics=("parallel", "parallel"))
    needed = int(step_vmem * 1.5)
    if needed > 16 * 1024 * 1024:
        compiler_kwargs["vmem_limit_bytes"] = min(needed, 48 * 1024 * 1024)

    outs = pl.pallas_call(
        kernel,
        grid=grid,
        in_specs=in_specs,
        out_specs=out_specs,
        out_shape=out_shape,
        compiler_params=pltpu.CompilerParams(**compiler_kwargs),
    )(*args)

    if return_scores:
        return outs[0], outs[1], outs[2]
    return outs[0], outs[1]


def _reference(q, k, v, d_k, prev=None, attn_mask=None):
    scores = jnp.matmul(q, k) / (float(d_k) ** 0.5)
    if attn_mask is not None:
        if attn_mask.dtype == jnp.bool_:
            scores = jnp.where(attn_mask, _NEG_INF, scores)
        else:
            scores = scores + attn_mask
    if prev is not None:
        scores = scores + prev
    attn = jax.nn.softmax(scores, axis=-1)
    ctx = jnp.matmul(attn, v)
    return ctx, attn, scores


if __name__ == "__main__":
    # Small shapes consistent with the module: batch=2, heads=2 -> BH=4,
    # seq=8, d_k=d_v=32.
    B, H, Lq, Lk, Dk, Dv = 2, 2, 8, 8, 32, 32
    BH = B * H
    d_k = Dk

    key = jax.random.PRNGKey(0)
    kq, kk, kv, km, kp = jax.random.split(key, 5)
    q = jax.random.normal(kq, (BH, Lq, Dk), dtype=jnp.float32)
    k = jax.random.normal(kk, (BH, Dk, Lk), dtype=jnp.float32)
    v = jax.random.normal(kv, (BH, Lk, Dv), dtype=jnp.float32)

    # 1) default path (no mask, no prev)
    ctx, attn = scaled_dot_product_attention(q, k, v, d_k)
    jax.block_until_ready(ctx)
    jax.block_until_ready(attn)
    ctx_ref, attn_ref, _ = _reference(q, k, v, d_k)
    assert jnp.allclose(ctx, ctx_ref, atol=5e-3, rtol=1e-2), "ctx mismatch (no mask)"
    assert jnp.allclose(attn, attn_ref, atol=2e-3, rtol=1e-2), "attn mismatch (no mask)"

    # 2) bool attn_mask + residual `prev` path, with the res_attention outputs
    attn_mask = jax.random.bernoulli(km, 0.25, (BH, Lq, Lk))
    prev = 0.5 * jax.random.normal(kp, (BH, Lq, Lk), dtype=jnp.float32)
    ctx2, attn2, sc2 = scaled_dot_product_attention(
        q, k, v, d_k, prev=prev, attn_mask=attn_mask, return_scores=True)
    jax.block_until_ready(ctx2)
    jax.block_until_ready(attn2)
    jax.block_until_ready(sc2)
    ctx2_ref, attn2_ref, sc2_ref = _reference(q, k, v, d_k, prev=prev,
                                              attn_mask=attn_mask)
    assert jnp.allclose(ctx2, ctx2_ref, atol=5e-3, rtol=1e-2), "ctx mismatch (mask+prev)"
    assert jnp.allclose(attn2, attn2_ref, atol=2e-3, rtol=1e-2), "attn mismatch (mask+prev)"
    # scores only need to agree on unmasked positions (masked fill value differs
    # from -inf by construction but produces identical softmax).
    unmasked = ~attn_mask
    assert jnp.allclose(jnp.where(unmasked, sc2, 0.0),
                        jnp.where(unmasked, sc2_ref, 0.0),
                        atol=5e-3, rtol=1e-2), "scores mismatch (mask+prev)"

    print("KERNEL_OK")
</pallas_src>

<mosaic_0001>
module attributes {stable_mosaic.version = 11 : i64} {
  func.func @_sdpa_kernel(%arg0: i32, %arg1: i32, %arg2: memref<4x8x32xf32, #tpu.memory_space<vmem>>, %arg3: memref<4x32x8xf32, #tpu.memory_space<vmem>>, %arg4: memref<4x8x32xf32, #tpu.memory_space<vmem>>, %arg5: memref<4x8x32xf32, #tpu.memory_space<vmem>>, %arg6: memref<4x8x8xf32, #tpu.memory_space<vmem>>) attributes {dimension_semantics = [#tpu.dimension_semantics<parallel>, #tpu.dimension_semantics<parallel>], iteration_bounds = array<i64: 1, 1>, scalar_prefetch = 0 : i64, scratch_operands = 0 : i64, tpu.core_type = #tpu.core_type<tc>, window_params = [{transform_indices = @transform_0, window_bounds = array<i64: 4, 8, 32>}, {transform_indices = @transform_1, window_bounds = array<i64: 4, 32, 8>}, {transform_indices = @transform_2, window_bounds = array<i64: 4, 8, 32>}, {transform_indices = @transform_3, window_bounds = array<i64: 4, 8, 32>}, {transform_indices = @transform_4, window_bounds = array<i64: 4, 8, 8>}]} {
    %c0 = arith.constant 0 : index
    %c0_0 = arith.constant 0 : index
    %c0_1 = arith.constant 0 : index
    %0 = vector.load %arg2[%c0, %c0_0, %c0_1] : memref<4x8x32xf32, #tpu.memory_space<vmem>>, vector<4x8x32xf32>
    %c0_2 = arith.constant 0 : index
    %c0_3 = arith.constant 0 : index
    %c0_4 = arith.constant 0 : index
    %1 = vector.load %arg3[%c0_2, %c0_3, %c0_4] : memref<4x32x8xf32, #tpu.memory_space<vmem>>, vector<4x32x8xf32>
    %c0_5 = arith.constant 0 : index
    %c0_6 = arith.constant 0 : index
    %c0_7 = arith.constant 0 : index
    %2 = vector.load %arg4[%c0_5, %c0_6, %c0_7] : memref<4x8x32xf32, #tpu.memory_space<vmem>>, vector<4x8x32xf32>
    %cst = arith.constant 0.176776692 : f32
    %3 = vector.broadcast %cst : f32 to vector<4x8x32xf32>
    %4 = arith.mulf %0, %3 : vector<4x8x32xf32>
    "tpu.trace_start"() <{level = 10 : i32, message = "bqd,bdk->bqk"}> : () -> ()
    %cst_8 = arith.constant dense<0.000000e+00> : vector<4x8x8xf32>
    %5 = tpu.matmul %4, %1, %cst_8 {dimension_numbers = #tpu.dot_dimension_numbers<[2], [1], [1], [2], [0, 0, 0, 1, 1, 2], [0], [0]>} : vector<4x8x32xf32>, vector<4x32x8xf32>, vector<4x8x8xf32> -> vector<4x8x8xf32>
    "tpu.trace_stop"() : () -> ()
    %cst_9 = arith.constant dense<0xFF800000> : vector<4x8xf32>
    %6 = vector.multi_reduction <maximumf>, %5, %cst_9 [2] : vector<4x8x8xf32> to vector<4x8xf32>
    %7 = vector.shape_cast %6 : vector<4x8xf32> to vector<4x8x1xf32>
    %8 = vector.broadcast %7 : vector<4x8x1xf32> to vector<4x8x8xf32>
    %9 = arith.subf %5, %8 : vector<4x8x8xf32>
    %10 = math.exp %9 : vector<4x8x8xf32>
    %cst_10 = arith.constant dense<0.000000e+00> : vector<4x8xf32>
    %11 = vector.multi_reduction <add>, %10, %cst_10 [2] : vector<4x8x8xf32> to vector<4x8xf32>
    %12 = vector.shape_cast %11 : vector<4x8xf32> to vector<4x8x1xf32>
    %13 = tpu.reciprocal %12 {approx = true} : vector<4x8x1xf32> -> vector<4x8x1xf32>
    %14 = arith.mulf %12, %13 : vector<4x8x1xf32>
    %cst_11 = arith.constant 2.000000e+00 : f32
    %15 = vector.broadcast %cst_11 : f32 to vector<4x8x1xf32>
    %16 = arith.subf %15, %14 : vector<4x8x1xf32>
    %17 = arith.mulf %13, %16 : vector<4x8x1xf32>
    %18 = vector.broadcast %17 : vector<4x8x1xf32> to vector<4x8x8xf32>
    %19 = arith.mulf %10, %18 : vector<4x8x8xf32>
    "tpu.trace_start"() <{level = 10 : i32, message = "bqk,bkd->bqd"}> : () -> ()
    %cst_12 = arith.constant dense<0.000000e+00> : vector<4x8x32xf32>
    %20 = tpu.matmul %19, %2, %cst_12 {dimension_numbers = #tpu.dot_dimension_numbers<[2], [1], [1], [2], [0, 0, 0, 1, 1, 2], [0], [0]>} : vector<4x8x8xf32>, vector<4x8x32xf32>, vector<4x8x32xf32> -> vector<4x8x32xf32>
    "tpu.trace_stop"() : () -> ()
    %c0_13 = arith.constant 0 : index
    %c0_14 = arith.constant 0 : index
    %c0_15 = arith.constant 0 : index
    %21 = vector.load %arg6[%c0_13, %c0_14, %c0_15] : memref<4x8x8xf32, #tpu.memory_space<vmem>>, vector<4x8x8xf32>
    tpu.vector_store %arg6[%c0_13, %c0_14, %c0_15], %19 {strides = array<i32>} : memref<4x8x8xf32, #tpu.memory_space<vmem>>, vector<4x8x8xf32>,
    %c0_16 = arith.constant 0 : index
    %c0_17 = arith.constant 0 : index
    %c0_18 = arith.constant 0 : index
    %22 = vector.load %arg5[%c0_16, %c0_17, %c0_18] : memref<4x8x32xf32, #tpu.memory_space<vmem>>, vector<4x8x32xf32>
    tpu.vector_store %arg5[%c0_16, %c0_17, %c0_18], %20 {strides = array<i32>} : memref<4x8x32xf32, #tpu.memory_space<vmem>>, vector<4x8x32xf32>,
    return
  }
  func.func @transform_0(%arg0: i32, %arg1: i32) -> (i32, i32, i32) {
    %c0_i32 = arith.constant 0 : i32
    %c0_i32_0 = arith.constant 0 : i32
    return %arg0, %arg1, %c0_i32 : i32, i32, i32
  }
  func.func @transform_1(%arg0: i32, %arg1: i32) -> (i32, i32, i32) {
    %c0_i32 = arith.constant 0 : i32
    %c0_i32_0 = arith.constant 0 : i32
    %c0_i32_1 = arith.constant 0 : i32
    return %arg0, %c0_i32, %c0_i32_0 : i32, i32, i32
  }
  func.func @transform_2(%arg0: i32, %arg1: i32) -> (i32, i32, i32) {
    %c0_i32 = arith.constant 0 : i32
    %c0_i32_0 = arith.constant 0 : i32
    %c0_i32_1 = arith.constant 0 : i32
    return %arg0, %c0_i32, %c0_i32_0 : i32, i32, i32
  }
  func.func @transform_3(%arg0: i32, %arg1: i32) -> (i32, i32, i32) {
    %c0_i32 = arith.constant 0 : i32
    %c0_i32_0 = arith.constant 0 : i32
    return %arg0, %arg1, %c0_i32 : i32, i32, i32
  }
  func.func @transform_4(%arg0: i32, %arg1: i32) -> (i32, i32, i32) {
    %c0_i32 = arith.constant 0 : i32
    %c0_i32_0 = arith.constant 0 : i32
    return %arg0, %arg1, %c0_i32 : i32, i32, i32
  }
}

</mosaic_0001>

<llo_original>
// kernel: tpu_custom_call.1
$region0: #{tpu_custom_call.1}
  #allocation0 [shape = 'u32[]', space=smem, size = 0x4, offset = 0x4, fixed_abs, tag = 'smem constant byte address 0x4 - core index']
  #allocation1 [shape = 'u32[144,128]{1,0:T(1,128)}', space=vmem, size = 0x12000, scoped, tag = 'internal scratch']
  %s0 = inlined_call_operand.vmem [shape: f32[4,8,32], index: 0, kind: input, shape index: {}]
  %s1 = inlined_call_operand.vmem [shape: f32[4,32,8], index: 1, kind: input, shape index: {}]
  %s2 = inlined_call_operand.vmem [shape: f32[4,8,32], index: 2, kind: input, shape index: {}]
  %s3 = inlined_call_operand.hbm [shape: f32[4,8,32], index: 3, kind: output, shape index: {0}]
  %s4 = inlined_call_operand.hbm [shape: f32[4,8,8], index: 4, kind: output, shape index: {1}]
  %5 = xla_tuple %s3, %s4
  %s6 = sld [smem:[#allocation0]]
  $region30: #{tpu_custom_call.1} parent=0
    _
  %s8 = ssub.s32 1, %s6
  %s9 = scalar_select 0, %s8, %s6
  $region1: #{tpu_custom_call.1} parent=0
    #allocation2 [shape = 'u8[16384]{0}', space=vmem, size = 0x4000, scoped, tag = 'output window, operand 0, single buffered']
    #allocation3 [shape = 's32[1]{0}', space=sflag, size = 0x4, scoped, tag = 'scoped memory for tpu_custom_call.1']
    #allocation4 [shape = 'u8[16384]{0}', space=vmem, size = 0x4000, scoped, tag = 'output window, operand 1, single buffered']
    #allocation5 [shape = 's32[1]{0}', space=sflag, size = 0x4, scoped, tag = 'scoped memory for tpu_custom_call.1']
    %10 = vsyncpa [#allocation3], 0
    %11 = vsyncpa [#allocation5], 0
    // Predicated region
    $region2: #{tpu_custom_call.1} parent=1 // pred_check
      _
    $region3: #{tpu_custom_call.1} parent=1 // pred_check_branch
      %13 = sbr.rel (0) target = $region5
    $region4: #{tpu_custom_call.1} parent=1 // pred_region
      _
    $region5: #{tpu_custom_call.1} parent=1 // pred_fallthru
      _
    // Predicated region
    $region6: #{tpu_custom_call.1} parent=1 // pred_check
      _
    $region7: #{tpu_custom_call.1} parent=1 // pred_check_branch
      %15 = sbr.rel (0) target = $region9
    $region8: #{tpu_custom_call.1} parent=1 // pred_region
      _
    $region9: #{tpu_custom_call.1} parent=1 // pred_fallthru
      _
    // Predicated region
    $region10: #{tpu_custom_call.1} parent=1 // pred_check
      _
    $region11: #{tpu_custom_call.1} parent=1 // pred_check_branch
      %17 = sbr.rel (0) target = $region13
    $region12: #{tpu_custom_call.1} parent=1 // pred_region
      _
    $region13: #{tpu_custom_call.1} parent=1 // pred_fallthru
      _
    %v18 = vld [vmem:[%s0] sm:$0xff]
    %v19 = vld [vmem:[%s0 + $0x8] sm:$0xff]
    %v20 = vld [vmem:[%s0 + $0x10] sm:$0xff]
    %v21 = vld [vmem:[%s0 + $0x18] sm:$0xff]
    %v22 = vld [vmem:[%s1] sm:$0xff]
    %v23 = vld [vmem:[%s1 + $0x8] sm:$0xff]
    %v24 = vld [vmem:[%s1 + $0x10] sm:$0xff]
    %v25 = vld [vmem:[%s1 + $0x18] sm:$0xff]
    %v26 = vld [vmem:[%s1 + $0x20] sm:$0xff]
    %v27 = vld [vmem:[%s1 + $0x28] sm:$0xff]
    %v28 = vld [vmem:[%s1 + $0x30] sm:$0xff]
    %v29 = vld [vmem:[%s1 + $0x38] sm:$0xff]
    %v30 = vld [vmem:[%s1 + $0x40] sm:$0xff]
    %v31 = vld [vmem:[%s1 + $0x48] sm:$0xff]
    %v32 = vld [vmem:[%s1 + $0x50] sm:$0xff]
    %v33 = vld [vmem:[%s1 + $0x58] sm:$0xff]
    %v34 = vld [vmem:[%s1 + $0x60] sm:$0xff]
    %v35 = vld [vmem:[%s1 + $0x68] sm:$0xff]
    %v36 = vld [vmem:[%s1 + $0x70] sm:$0xff]
    %v37 = vld [vmem:[%s1 + $0x78] sm:$0xff]
    %v38 = vld [vmem:[%s2] sm:$0xff]
    %v39 = vld [vmem:[%s2 + $0x8] sm:$0xff]
    %v40 = vld [vmem:[%s2 + $0x10] sm:$0xff]
    %v41 = vld [vmem:[%s2 + $0x18] sm:$0xff]
    %v42 = vmul.f32 %v18, 0.17677669
    %v43 = vmul.f32 %v19, 0.17677669
    %v44 = vmul.f32 %v20, 0.17677669
    %v45 = vmul.f32 %v21, 0.17677669
    %vm46 = vcmask 261120
    %v48 = vsel %vm46, %v42, 0
    %50 = vmatprep.subr.mxu0 0.0
    %51 = vmatpush1.msra.mxu0 0.0
    %52 = vmatprep.subr.mxu0 0.0
    %53 = vmatpush1.msra.mxu0 0.0
    %54 = vmatprep.subr.mxu0 0.0
    %55 = vmatpush1.msra.mxu0 0.0
    %56 = vmatprep.subr.mxu0 0.0
    %57 = vmatpush1.msra.mxu0 0.0
    %58 = vmatprep.subr.mxu0 0.0
    %59 = vmatpush1.msra.mxu0 0.0
    %60 = vmatprep.subr.mxu0 0.0
    %61 = vmatpush1.msra.mxu0 0.0
    %62 = vmatprep.subr.mxu0 0.0
    %63 = vmatpush1.msra.mxu0 0.0
    %64 = vmatprep.subr.mxu0 0.0
    %65 = vmatpush1.msra.mxu0 0.0
    %66 = vmatprep.subr.mxu0 0.0
    %67 = vmatpush1.msra.mxu0 0.0
    %68 = vmatprep.subr.mxu0 0.0
    %69 = vmatpush1.msra.mxu0 0.0
    %70 = vmatprep.subr.mxu0 0.0
    %71 = vmatpush1.msra.mxu0 0.0
    %72 = vmatprep.subr.mxu0 0.0
    %73 = vmatpush1.msra.mxu0 0.0
    %74 = vmatprep.subr.mxu0 0.0
    %75 = vmatpush1.msra.mxu0 %v25
    %76 = vmatprep.subr.mxu0 0.0
    %77 = vmatpush1.msra.mxu0 %v24
    %78 = vmatprep.subr.mxu0 0.0
    %79 = vmatpush1.msra.mxu0 %v23
    %80 = vmatprep.subr.mxu0 0.0
    %81 = vmatpush1.msra.mxu0 %v22
    %82 = vmatprep.subr.mxu0 0.0
    %83 = vmatpush2.msra.mxu0 0.0
    %84 = vmatprep.subr.mxu0 0.0
    %85 = vmatpush2.msra.mxu0 0.0
    %86 = vmatprep.subr.mxu0 0.0
    %87 = vmatpush2.msra.mxu0 0.0
    %88 = vmatprep.subr.mxu0 0.0
    %89 = vmatpush2.msra.mxu0 0.0
    %90 = vmatprep.subr.mxu0 0.0
    %91 = vmatpush2.msra.mxu0 0.0
    %92 = vmatprep.subr.mxu0 0.0
    %93 = vmatpush2.msra.mxu0 0.0
    %94 = vmatprep.subr.mxu0 0.0
    %95 = vmatpush2.msra.mxu0 0.0
    %96 = vmatprep.subr.mxu0 0.0
    %97 = vmatpush2.msra.mxu0 0.0
    %98 = vmatprep.subr.mxu0 0.0
    %99 = vmatpush2.msra.mxu0 0.0
    %100 = vmatprep.subr.mxu0 0.0
    %101 = vmatpush2.msra.mxu0 0.0
    %102 = vmatprep.subr.mxu0 0.0
    %103 = vmatpush2.msra.mxu0 0.0
    %104 = vmatprep.subr.mxu0 0.0
    %105 = vmatpush2.msra.mxu0 0.0
    %106 = vmatprep.subr.mxu0 0.0
    %107 = vmatpush2.msra.mxu0 0.0
    %108 = vmatprep.subr.mxu0 0.0
    %109 = vmatpush2.msra.mxu0 0.0
    %110 = vmatprep.subr.mxu0 0.0
    %111 = vmatpush2.msra.mxu0 0.0
    %112 = vmatprep.subr.mxu0 0.0
    %113 = vmatpush2.msra.mxu0 0.0
    %114 = vmatprep.mubr.f32.mxu0 0.0
    %115 = vmatmul.mubr.f32.gmra.mxu0 %v48
    %v116 = vpop.f32.mrf.mxu0
    %v117 = vadd.f32 0.0, %v116
    %v118 = vpop.f32.mrf.mxu0
    %119 = vdwg.mxu0
    %v121 = vsel %vm46, %v43, 0
    %123 = vmatprep.subr.mxu0 0.0
    %124 = vmatpush1.msra.mxu0 0.0
    %125 = vmatprep.subr.mxu0 0.0
    %126 = vmatpush1.msra.mxu0 0.0
    %127 = vmatprep.subr.mxu0 0.0
    %128 = vmatpush1.msra.mxu0 0.0
    %129 = vmatprep.subr.mxu0 0.0
    %130 = vmatpush1.msra.mxu0 0.0
    %131 = vmatprep.subr.mxu0 0.0
    %132 = vmatpush1.msra.mxu0 0.0
    %133 = vmatprep.subr.mxu0 0.0
    %134 = vmatpush1.msra.mxu0 0.0
    %135 = vmatprep.subr.mxu0 0.0
    %136 = vmatpush1.msra.mxu0 0.0
    %137 = vmatprep.subr.mxu0 0.0
    %138 = vmatpush1.msra.mxu0 0.0
    %139 = vmatprep.subr.mxu0 0.0
    %140 = vmatpush1.msra.mxu0 0.0
    %141 = vmatprep.subr.mxu0 0.0
    %142 = vmatpush1.msra.mxu0 0.0
    %143 = vmatprep.subr.mxu0 0.0
    %144 = vmatpush1.msra.mxu0 0.0
    %145 = vmatprep.subr.mxu0 0.0
    %146 = vmatpush1.msra.mxu0 0.0
    %147 = vmatprep.subr.mxu0 0.0
    %148 = vmatpush1.msra.mxu0 %v29
    %149 = vmatprep.subr.mxu0 0.0
    %150 = vmatpush1.msra.mxu0 %v28
    %151 = vmatprep.subr.mxu0 0.0
    %152 = vmatpush1.msra.mxu0 %v27
    %153 = vmatprep.subr.mxu0 0.0
    %154 = vmatpush1.msra.mxu0 %v26
    %155 = vmatprep.subr.mxu0 0.0
    %156 = vmatpush2.msra.mxu0 0.0
    %157 = vmatprep.subr.mxu0 0.0
    %158 = vmatpush2.msra.mxu0 0.0
    %159 = vmatprep.subr.mxu0 0.0
    %160 = vmatpush2.msra.mxu0 0.0
    %161 = vmatprep.subr.mxu0 0.0
    %162 = vmatpush2.msra.mxu0 0.0
    %163 = vmatprep.subr.mxu0 0.0
    %164 = vmatpush2.msra.mxu0 0.0
    %165 = vmatprep.subr.mxu0 0.0
    %166 = vmatpush2.msra.mxu0 0.0
    %167 = vmatprep.subr.mxu0 0.0
    %168 = vmatpush2.msra.mxu0 0.0
    %169 = vmatprep.subr.mxu0 0.0
    %170 = vmatpush2.msra.mxu0 0.0
    %171 = vmatprep.subr.mxu0 0.0
    %172 = vmatpush2.msra.mxu0 0.0
    %173 = vmatprep.subr.mxu0 0.0
    %174 = vmatpush2.msra.mxu0 0.0
    %175 = vmatprep.subr.mxu0 0.0
    %176 = vmatpush2.msra.mxu0 0.0
    %177 = vmatprep.subr.mxu0 0.0
    %178 = vmatpush2.msra.mxu0 0.0
    %179 = vmatprep.subr.mxu0 0.0
    %180 = vmatpush2.msra.mxu0 0.0
    %181 = vmatprep.subr.mxu0 0.0
    %182 = vmatpush2.msra.mxu0 0.0
    %183 = vmatprep.subr.mxu0 0.0
    %184 = vmatpush2.msra.mxu0 0.0
    %185 = vmatprep.subr.mxu0 0.0
    %186 = vmatpush2.msra.mxu0 0.0
    %187 = vmatprep.mubr.f32.mxu0 0.0
    %188 = vmatmul.mubr.f32.gmra.mxu0 %v121
    %v189 = vpop.f32.mrf.mxu0
    %v190 = vadd.f32 0.0, %v189
    %v191 = vpop.f32.mrf.mxu0
    %192 = vdwg.mxu0
    %v194 = vsel %vm46, %v44, 0
    %196 = vmatprep.subr.mxu0 0.0
    %197 = vmatpush1.msra.mxu0 0.0
    %198 = vmatprep.subr.mxu0 0.0
    %199 = vmatpush1.msra.mxu0 0.0
    %200 = vmatprep.subr.mxu0 0.0
    %201 = vmatpush1.msra.mxu0 0.0
    %202 = vmatprep.subr.mxu0 0.0
    %203 = vmatpush1.msra.mxu0 0.0
    %204 = vmatprep.subr.mxu0 0.0
    %205 = vmatpush1.msra.mxu0 0.0
    %206 = vmatprep.subr.mxu0 0.0
    %207 = vmatpush1.msra.mxu0 0.0
    %208 = vmatprep.subr.mxu0 0.0
    %209 = vmatpush1.msra.mxu0 0.0
    %210 = vmatprep.subr.mxu0 0.0
    %211 = vmatpush1.msra.mxu0 0.0
    %212 = vmatprep.subr.mxu0 0.0
    %213 = vmatpush1.msra.mxu0 0.0
    %214 = vmatprep.subr.mxu0 0.0
    %215 = vmatpush1.msra.mxu0 0.0
    %216 = vmatprep.subr.mxu0 0.0
    %217 = vmatpush1.msra.mxu0 0.0
    %218 = vmatprep.subr.mxu0 0.0
    %219 = vmatpush1.msra.mxu0 0.0
    %220 = vmatprep.subr.mxu0 0.0
    %221 = vmatpush1.msra.mxu0 %v33
    %222 = vmatprep.subr.mxu0 0.0
    %223 = vmatpush1.msra.mxu0 %v32
    %224 = vmatprep.subr.mxu0 0.0
    %225 = vmatpush1.msra.mxu0 %v31
    %226 = vmatprep.subr.mxu0 0.0
    %227 = vmatpush1.msra.mxu0 %v30
    %228 = vmatprep.subr.mxu0 0.0
    %229 = vmatpush2.msra.mxu0 0.0
    %230 = vmatprep.subr.mxu0 0.0
    %231 = vmatpush2.msra.mxu0 0.0
    %232 = vmatprep.subr.mxu0 0.0
    %233 = vmatpush2.msra.mxu0 0.0
    %234 = vmatprep.subr.mxu0 0.0
    %235 = vmatpush2.msra.mxu0 0.0
    %236 = vmatprep.subr.mxu0 0.0
    %237 = vmatpush2.msra.mxu0 0.0
    %238 = vmatprep.subr.mxu0 0.0
    %239 = vmatpush2.msra.mxu0 0.0
    %240 = vmatprep.subr.mxu0 0.0
    %241 = vmatpush2.msra.mxu0 0.0
    %242 = vmatprep.subr.mxu0 0.0
    %243 = vmatpush2.msra.mxu0 0.0
    %244 = vmatprep.subr.mxu0 0.0
    %245 = vmatpush2.msra.mxu0 0.0
    %246 = vmatprep.subr.mxu0 0.0
    %247 = vmatpush2.msra.mxu0 0.0
    %248 = vmatprep.subr.mxu0 0.0
    %249 = vmatpush2.msra.mxu0 0.0
    %250 = vmatprep.subr.mxu0 0.0
    %251 = vmatpush2.msra.mxu0 0.0
    %252 = vmatprep.subr.mxu0 0.0
    %253 = vmatpush2.msra.mxu0 0.0
    %254 = vmatprep.subr.mxu0 0.0
    %255 = vmatpush2.msra.mxu0 0.0
    %256 = vmatprep.subr.mxu0 0.0
    %257 = vmatpush2.msra.mxu0 0.0
    %258 = vmatprep.subr.mxu0 0.0
    %259 = vmatpush2.msra.mxu0 0.0
    %260 = vmatprep.mubr.f32.mxu0 0.0
    %261 = vmatmul.mubr.f32.gmra.mxu0 %v194
    %v262 = vpop.f32.mrf.mxu0
    %v263 = vadd.f32 0.0, %v262
    %v264 = vpop.f32.mrf.mxu0
    %265 = vdwg.mxu0
    %v267 = vsel %vm46, %v45, 0
    %269 = vmatprep.subr.mxu0 0.0
    %270 = vmatpush1.msra.mxu0 0.0
    %271 = vmatprep.subr.mxu0 0.0
    %272 = vmatpush1.msra.mxu0 0.0
    %273 = vmatprep.subr.mxu0 0.0
    %274 = vmatpush1.msra.mxu0 0.0
    %275 = vmatprep.subr.mxu0 0.0
    %276 = vmatpush1.msra.mxu0 0.0
    %277 = vmatprep.subr.mxu0 0.0
    %278 = vmatpush1.msra.mxu0 0.0
    %279 = vmatprep.subr.mxu0 0.0
    %280 = vmatpush1.msra.mxu0 0.0
    %281 = vmatprep.subr.mxu0 0.0
    %282 = vmatpush1.msra.mxu0 0.0
    %283 = vmatprep.subr.mxu0 0.0
    %284 = vmatpush1.msra.mxu0 0.0
    %285 = vmatprep.subr.mxu0 0.0
    %286 = vmatpush1.msra.mxu0 0.0
    %287 = vmatprep.subr.mxu0 0.0
    %288 = vmatpush1.msra.mxu0 0.0
    %289 = vmatprep.subr.mxu0 0.0
    %290 = vmatpush1.msra.mxu0 0.0
    %291 = vmatprep.subr.mxu0 0.0
    %292 = vmatpush1.msra.mxu0 0.0
    %293 = vmatprep.subr.mxu0 0.0
    %294 = vmatpush1.msra.mxu0 %v37
    %295 = vmatprep.subr.mxu0 0.0
    %296 = vmatpush1.msra.mxu0 %v36
    %297 = vmatprep.subr.mxu0 0.0
    %298 = vmatpush1.msra.mxu0 %v35
    %299 = vmatprep.subr.mxu0 0.0
    %300 = vmatpush1.msra.mxu0 %v34
    %301 = vmatprep.subr.mxu0 0.0
    %302 = vmatpush2.msra.mxu0 0.0
    %303 = vmatprep.subr.mxu0 0.0
    %304 = vmatpush2.msra.mxu0 0.0
    %305 = vmatprep.subr.mxu0 0.0
    %306 = vmatpush2.msra.mxu0 0.0
    %307 = vmatprep.subr.mxu0 0.0
    %308 = vmatpush2.msra.mxu0 0.0
    %309 = vmatprep.subr.mxu0 0.0
    %310 = vmatpush2.msra.mxu0 0.0
    %311 = vmatprep.subr.mxu0 0.0
    %312 = vmatpush2.msra.mxu0 0.0
    %313 = vmatprep.subr.mxu0 0.0
    %314 = vmatpush2.msra.mxu0 0.0
    %315 = vmatprep.subr.mxu0 0.0
    %316 = vmatpush2.msra.mxu0 0.0
    %317 = vmatprep.subr.mxu0 0.0
    %318 = vmatpush2.msra.mxu0 0.0
    %319 = vmatprep.subr.mxu0 0.0
    %320 = vmatpush2.msra.mxu0 0.0
    %321 = vmatprep.subr.mxu0 0.0
    %322 = vmatpush2.msra.mxu0 0.0
    %323 = vmatprep.subr.mxu0 0.0
    %324 = vmatpush2.msra.mxu0 0.0
    %325 = vmatprep.subr.mxu0 0.0
    %326 = vmatpush2.msra.mxu0 0.0
    %327 = vmatprep.subr.mxu0 0.0
    %328 = vmatpush2.msra.mxu0 0.0
    %329 = vmatprep.subr.mxu0 0.0
    %330 = vmatpush2.msra.mxu0 0.0
    %331 = vmatprep.subr.mxu0 0.0
    %332 = vmatpush2.msra.mxu0 0.0
    %333 = vmatprep.mubr.f32.mxu0 0.0
    %334 = vmatmul.mubr.f32.gmra.mxu0 %v267
    %v335 = vpop.f32.mrf.mxu0
    %v336 = vadd.f32 0.0, %v335
    %v337 = vpop.f32.mrf.mxu0
    %338 = vdwg.mxu0
    %vm339 = vcmask 64512
    %v340 = vsel %vm339, %v117, -inf
    %341 = vmax.xlane.f32.xlu0 %v340
    %v342 = vpop.xlane.xlu0 %341
    %v343 = vsel %vm339, %v190, -inf
    %344 = vmax.xlane.f32.xlu0 %v343
    %v345 = vpop.xlane.xlu0 %344
    %v346 = vsel %vm339, %v263, -inf
    %347 = vmax.xlane.f32.xlu0 %v346
    %v348 = vpop.xlane.xlu0 %347
    %v349 = vsel %vm339, %v336, -inf
    %350 = vmax.xlane.f32.xlu0 %v349
    %v351 = vpop.xlane.xlu0 %350
    %v352 = vsub.f32 %v117, %v342
    %v353 = vsub.f32 %v190, %v345
    %v354 = vsub.f32 %v263, %v348
    %v355 = vsub.f32 %v336, %v351
    %v356 = vmul.f32 %v352, 1.442695
    %v357 = vpow.pop %v356
    %v358 = vmul.f32 %v353, 1.442695
    %v359 = vpow.pop %v358
    %v360 = vmul.f32 %v354, 1.442695
    %v361 = vpow.pop %v360
    %v362 = vmul.f32 %v355, 1.442695
    %v363 = vpow.pop %v362
    %v364 = vsel %vm339, %v357, 0.0
    %365 = vadd.xlane.f32.xlu0 %v364
    %v366 = vpop.xlane.xlu0 %365
    %v367 = vsel %vm339, %v359, 0.0
    %368 = vadd.xlane.f32.xlu0 %v367
    %v369 = vpop.xlane.xlu0 %368
    %v370 = vsel %vm339, %v361, 0.0
    %371 = vadd.xlane.f32.xlu0 %v370
    %v372 = vpop.xlane.xlu0 %371
    %v373 = vsel %vm339, %v363, 0.0
    %374 = vadd.xlane.f32.xlu0 %v373
    %v375 = vpop.xlane.xlu0 %374
    %v376 = vrcp.pop %v366
    %v377 = vrcp.pop %v369
    %v378 = vrcp.pop %v372
    %v379 = vrcp.pop %v375
    %v380 = vmul.f32 %v366, %v376
    %v381 = vmul.f32 %v369, %v377
    %v382 = vmul.f32 %v372, %v378
    %v383 = vmul.f32 %v375, %v379
    %v384 = vsub.f32 2.0, %v380
    %v385 = vsub.f32 2.0, %v381
    %v386 = vsub.f32 2.0, %v382
    %v387 = vsub.f32 2.0, %v383
    %v388 = vmul.f32 %v376, %v384
    %v389 = vmul.f32 %v377, %v385
    %v390 = vmul.f32 %v378, %v386
    %v391 = vmul.f32 %v379, %v387
    %v392 = vmul.f32 %v357, %v388
    %v393 = vmul.f32 %v359, %v389
    %v394 = vmul.f32 %v361, %v390
    %v395 = vmul.f32 %v363, %v391
    %v397 = vsel %vm339, %v392, 0
    %399 = vmatprep.subr.mxu0 0.0
    %400 = vmatpush1.msra.mxu0 0.0
    %401 = vmatprep.subr.mxu0 0.0
    %402 = vmatpush1.msra.mxu0 0.0
    %403 = vmatprep.subr.mxu0 0.0
    %404 = vmatpush1.msra.mxu0 0.0
    %405 = vmatprep.subr.mxu0 0.0
    %406 = vmatpush1.msra.mxu0 0.0
    %407 = vmatprep.subr.mxu0 0.0
    %408 = vmatpush1.msra.mxu0 0.0
    %409 = vmatprep.subr.mxu0 0.0
    %410 = vmatpush1.msra.mxu0 0.0
    %411 = vmatprep.subr.mxu0 0.0
    %412 = vmatpush1.msra.mxu0 0.0
    %413 = vmatprep.subr.mxu0 0.0
    %414 = vmatpush1.msra.mxu0 0.0
    %415 = vmatprep.subr.mxu0 0.0
    %416 = vmatpush1.msra.mxu0 0.0
    %417 = vmatprep.subr.mxu0 0.0
    %418 = vmatpush1.msra.mxu0 0.0
    %419 = vmatprep.subr.mxu0 0.0
    %420 = vmatpush1.msra.mxu0 0.0
    %421 = vmatprep.subr.mxu0 0.0
    %422 = vmatpush1.msra.mxu0 0.0
    %423 = vmatprep.subr.mxu0 0.0
    %424 = vmatpush1.msra.mxu0 0.0
    %425 = vmatprep.subr.mxu0 0.0
    %426 = vmatpush1.msra.mxu0 0.0
    %427 = vmatprep.subr.mxu0 0.0
    %428 = vmatpush1.msra.mxu0 0.0
    %429 = vmatprep.subr.mxu0 0.0
    %430 = vmatpush1.msra.mxu0 %v38
    %431 = vmatprep.subr.mxu0 0.0
    %432 = vmatpush2.msra.mxu0 0.0
    %433 = vmatprep.subr.mxu0 0.0
    %434 = vmatpush2.msra.mxu0 0.0
    %435 = vmatprep.subr.mxu0 0.0
    %436 = vmatpush2.msra.mxu0 0.0
    %437 = vmatprep.subr.mxu0 0.0
    %438 = vmatpush2.msra.mxu0 0.0
    %439 = vmatprep.subr.mxu0 0.0
    %440 = vmatpush2.msra.mxu0 0.0
    %441 = vmatprep.subr.mxu0 0.0
    %442 = vmatpush2.msra.mxu0 0.0
    %443 = vmatprep.subr.mxu0 0.0
    %444 = vmatpush2.msra.mxu0 0.0
    %445 = vmatprep.subr.mxu0 0.0
    %446 = vmatpush2.msra.mxu0 0.0
    %447 = vmatprep.subr.mxu0 0.0
    %448 = vmatpush2.msra.mxu0 0.0
    %449 = vmatprep.subr.mxu0 0.0
    %450 = vmatpush2.msra.mxu0 0.0
    %451 = vmatprep.subr.mxu0 0.0
    %452 = vmatpush2.msra.mxu0 0.0
    %453 = vmatprep.subr.mxu0 0.0
    %454 = vmatpush2.msra.mxu0 0.0
    %455 = vmatprep.subr.mxu0 0.0
    %456 = vmatpush2.msra.mxu0 0.0
    %457 = vmatprep.subr.mxu0 0.0
    %458 = vmatpush2.msra.mxu0 0.0
    %459 = vmatprep.subr.mxu0 0.0
    %460 = vmatpush2.msra.mxu0 0.0
    %461 = vmatprep.subr.mxu0 0.0
    %462 = vmatpush2.msra.mxu0 0.0
    %463 = vmatprep.mubr.f32.mxu0 0.0
    %464 = vmatmul.mubr.f32.gmra.mxu0 %v397
    %v465 = vpop.f32.mrf.mxu0
    %v466 = vadd.f32 0.0, %v465
    %v467 = vpop.f32.mrf.mxu0
    %468 = vdwg.mxu0
    %v470 = vsel %vm339, %v393, 0
    %472 = vmatprep.subr.mxu0 0.0
    %473 = vmatpush1.msra.mxu0 0.0
    %474 = vmatprep.subr.mxu0 0.0
    %475 = vmatpush1.msra.mxu0 0.0
    %476 = vmatprep.subr.mxu0 0.0
    %477 = vmatpush1.msra.mxu0 0.0
    %478 = vmatprep.subr.mxu0 0.0
    %479 = vmatpush1.msra.mxu0 0.0
    %480 = vmatprep.subr.mxu0 0.0
    %481 = vmatpush1.msra.mxu0 0.0
    %482 = vmatprep.subr.mxu0 0.0
    %483 = vmatpush1.msra.mxu0 0.0
    %484 = vmatprep.subr.mxu0 0.0
    %485 = vmatpush1.msra.mxu0 0.0
    %486 = vmatprep.subr.mxu0 0.0
    %487 = vmatpush1.msra.mxu0 0.0
    %488 = vmatprep.subr.mxu0 0.0
    %489 = vmatpush1.msra.mxu0 0.0
    %490 = vmatprep.subr.mxu0 0.0
    %491 = vmatpush1.msra.mxu0 0.0
    %492 = vmatprep.subr.mxu0 0.0
    %493 = vmatpush1.msra.mxu0 0.0
    %494 = vmatprep.subr.mxu0 0.0
    %495 = vmatpush1.msra.mxu0 0.0
    %496 = vmatprep.subr.mxu0 0.0
    %497 = vmatpush1.msra.mxu0 0.0
    %498 = vmatprep.subr.mxu0 0.0
    %499 = vmatpush1.msra.mxu0 0.0
    %500 = vmatprep.subr.mxu0 0.0
    %501 = vmatpush1.msra.mxu0 0.0
    %502 = vmatprep.subr.mxu0 0.0
    %503 = vmatpush1.msra.mxu0 %v39
    %504 = vmatprep.subr.mxu0 0.0
    %505 = vmatpush2.msra.mxu0 0.0
    %506 = vmatprep.subr.mxu0 0.0
    %507 = vmatpush2.msra.mxu0 0.0
    %508 = vmatprep.subr.mxu0 0.0
    %509 = vmatpush2.msra.mxu0 0.0
    %510 = vmatprep.subr.mxu0 0.0
    %511 = vmatpush2.msra.mxu0 0.0
    %512 = vmatprep.subr.mxu0 0.0
    %513 = vmatpush2.msra.mxu0 0.0
    %514 = vmatprep.subr.mxu0 0.0
    %515 = vmatpush2.msra.mxu0 0.0
    %516 = vmatprep.subr.mxu0 0.0
    %517 = vmatpush2.msra.mxu0 0.0
    %518 = vmatprep.subr.mxu0 0.0
    %519 = vmatpush2.msra.mxu0 0.0
    %520 = vmatprep.subr.mxu0 0.0
    %521 = vmatpush2.msra.mxu0 0.0
    %522 = vmatprep.subr.mxu0 0.0
    %523 = vmatpush2.msra.mxu0 0.0
    %524 = vmatprep.subr.mxu0 0.0
    %525 = vmatpush2.msra.mxu0 0.0
    %526 = vmatprep.subr.mxu0 0.0
    %527 = vmatpush2.msra.mxu0 0.0
    %528 = vmatprep.subr.mxu0 0.0
    %529 = vmatpush2.msra.mxu0 0.0
    %530 = vmatprep.subr.mxu0 0.0
    %531 = vmatpush2.msra.mxu0 0.0
    %532 = vmatprep.subr.mxu0 0.0
    %533 = vmatpush2.msra.mxu0 0.0
    %534 = vmatprep.subr.mxu0 0.0
    %535 = vmatpush2.msra.mxu0 0.0
    %536 = vmatprep.mubr.f32.mxu0 0.0
    %537 = vmatmul.mubr.f32.gmra.mxu0 %v470
    %v538 = vpop.f32.mrf.mxu0
    %v539 = vadd.f32 0.0, %v538
    %v540 = vpop.f32.mrf.mxu0
    %541 = vdwg.mxu0
    %v543 = vsel %vm339, %v394, 0
    %545 = vmatprep.subr.mxu0 0.0
    %546 = vmatpush1.msra.mxu0 0.0
    %547 = vmatprep.subr.mxu0 0.0
    %548 = vmatpush1.msra.mxu0 0.0
    %549 = vmatprep.subr.mxu0 0.0
    %550 = vmatpush1.msra.mxu0 0.0
    %551 = vmatprep.subr.mxu0 0.0
    %552 = vmatpush1.msra.mxu0 0.0
    %553 = vmatprep.subr.mxu0 0.0
    %554 = vmatpush1.msra.mxu0 0.0
    %555 = vmatprep.subr.mxu0 0.0
    %556 = vmatpush1.msra.mxu0 0.0
    %557 = vmatprep.subr.mxu0 0.0
    %558 = vmatpush1.msra.mxu0 0.0
    %559 = vmatprep.subr.mxu0 0.0
    %560 = vmatpush1.msra.mxu0 0.0
    %561 = vmatprep.subr.mxu0 0.0
    %562 = vmatpush1.msra.mxu0 0.0
    %563 = vmatprep.subr.mxu0 0.0
    %564 = vmatpush1.msra.mxu0 0.0
    %565 = vmatprep.subr.mxu0 0.0
    %566 = vmatpush1.msra.mxu0 0.0
    %567 = vmatprep.subr.mxu0 0.0
    %568 = vmatpush1.msra.mxu0 0.0
    %569 = vmatprep.subr.mxu0 0.0
    %570 = vmatpush1.msra.mxu0 0.0
    %571 = vmatprep.subr.mxu0 0.0
    %572 = vmatpush1.msra.mxu0 0.0
    %573 = vmatprep.subr.mxu0 0.0
    %574 = vmatpush1.msra.mxu0 0.0
    %575 = vmatprep.subr.mxu0 0.0
    %576 = vmatpush1.msra.mxu0 %v40
    %577 = vmatprep.subr.mxu0 0.0
    %578 = vmatpush2.msra.mxu0 0.0
    %579 = vmatprep.subr.mxu0 0.0
    %580 = vmatpush2.msra.mxu0 0.0
    %581 = vmatprep.subr.mxu0 0.0
    %582 = vmatpush2.msra.mxu0 0.0
    %583 = vmatprep.subr.mxu0 0.0
    %584 = vmatpush2.msra.mxu0 0.0
    %585 = vmatprep.subr.mxu0 0.0
    %586 = vmatpush2.msra.mxu0 0.0
    %587 = vmatprep.subr.mxu0 0.0
    %588 = vmatpush2.msra.mxu0 0.0
    %589 = vmatprep.subr.mxu0 0.0
    %590 = vmatpush2.msra.mxu0 0.0
    %591 = vmatprep.subr.mxu0 0.0
    %592 = vmatpush2.msra.mxu0 0.0
    %593 = vmatprep.subr.mxu0 0.0
    %594 = vmatpush2.msra.mxu0 0.0
    %595 = vmatprep.subr.mxu0 0.0
    %596 = vmatpush2.msra.mxu0 0.0
    %597 = vmatprep.subr.mxu0 0.0
    %598 = vmatpush2.msra.mxu0 0.0
    %599 = vmatprep.subr.mxu0 0.0
    %600 = vmatpush2.msra.mxu0 0.0
    %601 = vmatprep.subr.mxu0 0.0
    %602 = vmatpush2.msra.mxu0 0.0
    %603 = vmatprep.subr.mxu0 0.0
    %604 = vmatpush2.msra.mxu0 0.0
    %605 = vmatprep.subr.mxu0 0.0
    %606 = vmatpush2.msra.mxu0 0.0
    %607 = vmatprep.subr.mxu0 0.0
    %608 = vmatpush2.msra.mxu0 0.0
    %609 = vmatprep.mubr.f32.mxu0 0.0
    %610 = vmatmul.mubr.f32.gmra.mxu0 %v543
    %v611 = vpop.f32.mrf.mxu0
    %v612 = vadd.f32 0.0, %v611
    %v613 = vpop.f32.mrf.mxu0
    %614 = vdwg.mxu0
    %v616 = vsel %vm339, %v395, 0
    %618 = vmatprep.subr.mxu0 0.0
    %619 = vmatpush1.msra.mxu0 0.0
    %620 = vmatprep.subr.mxu0 0.0
    %621 = vmatpush1.msra.mxu0 0.0
    %622 = vmatprep.subr.mxu0 0.0
    %623 = vmatpush1.msra.mxu0 0.0
    %624 = vmatprep.subr.mxu0 0.0
    %625 = vmatpush1.msra.mxu0 0.0
    %626 = vmatprep.subr.mxu0 0.0
    %627 = vmatpush1.msra.mxu0 0.0
    %628 = vmatprep.subr.mxu0 0.0
    %629 = vmatpush1.msra.mxu0 0.0
    %630 = vmatprep.subr.mxu0 0.0
    %631 = vmatpush1.msra.mxu0 0.0
    %632 = vmatprep.subr.mxu0 0.0
    %633 = vmatpush1.msra.mxu0 0.0
    %634 = vmatprep.subr.mxu0 0.0
    %635 = vmatpush1.msra.mxu0 0.0
    %636 = vmatprep.subr.mxu0 0.0
    %637 = vmatpush1.msra.mxu0 0.0
    %638 = vmatprep.subr.mxu0 0.0
    %639 = vmatpush1.msra.mxu0 0.0
    %640 = vmatprep.subr.mxu0 0.0
    %641 = vmatpush1.msra.mxu0 0.0
    %642 = vmatprep.subr.mxu0 0.0
    %643 = vmatpush1.msra.mxu0 0.0
    %644 = vmatprep.subr.mxu0 0.0
    %645 = vmatpush1.msra.mxu0 0.0
    %646 = vmatprep.subr.mxu0 0.0
    %647 = vmatpush1.msra.mxu0 0.0
    %648 = vmatprep.subr.mxu0 0.0
    %649 = vmatpush1.msra.mxu0 %v41
    %650 = vmatprep.subr.mxu0 0.0
    %651 = vmatpush2.msra.mxu0 0.0
    %652 = vmatprep.subr.mxu0 0.0
    %653 = vmatpush2.msra.mxu0 0.0
    %654 = vmatprep.subr.mxu0 0.0
    %655 = vmatpush2.msra.mxu0 0.0
    %656 = vmatprep.subr.mxu0 0.0
    %657 = vmatpush2.msra.mxu0 0.0
    %658 = vmatprep.subr.mxu0 0.0
    %659 = vmatpush2.msra.mxu0 0.0
    %660 = vmatprep.subr.mxu0 0.0
    %661 = vmatpush2.msra.mxu0 0.0
    %662 = vmatprep.subr.mxu0 0.0
    %663 = vmatpush2.msra.mxu0 0.0
    %664 = vmatprep.subr.mxu0 0.0
    %665 = vmatpush2.msra.mxu0 0.0
    %666 = vmatprep.subr.mxu0 0.0
    %667 = vmatpush2.msra.mxu0 0.0
    %668 = vmatprep.subr.mxu0 0.0
    %669 = vmatpush2.msra.mxu0 0.0
    %670 = vmatprep.subr.mxu0 0.0
    %671 = vmatpush2.msra.mxu0 0.0
    %672 = vmatprep.subr.mxu0 0.0
    %673 = vmatpush2.msra.mxu0 0.0
    %674 = vmatprep.subr.mxu0 0.0
    %675 = vmatpush2.msra.mxu0 0.0
    %676 = vmatprep.subr.mxu0 0.0
    %677 = vmatpush2.msra.mxu0 0.0
    %678 = vmatprep.subr.mxu0 0.0
    %679 = vmatpush2.msra.mxu0 0.0
    %680 = vmatprep.subr.mxu0 0.0
    %681 = vmatpush2.msra.mxu0 0.0
    %682 = vmatprep.mubr.f32.mxu0 0.0
    %683 = vmatmul.mubr.f32.gmra.mxu0 %v616
    %v684 = vpop.f32.mrf.mxu0
    %v685 = vadd.f32 0.0, %v684
    %v686 = vpop.f32.mrf.mxu0
    %687 = vdwg.mxu0
    %688 = vst.msk [vmem:[#allocation4] sm:$0xff] %vm339, %v392
    %689 = vst.msk [vmem:[#allocation4 + $0x8] sm:$0xff] %vm339, %v393
    %690 = vst.msk [vmem:[#allocation4 + $0x10] sm:$0xff] %vm339, %v394
    %691 = vst.msk [vmem:[#allocation4 + $0x18] sm:$0xff] %vm339, %v395
    %692 = vst.msk [vmem:[#allocation2] sm:$0xff] %vm46, %v466
    %693 = vst.msk [vmem:[#allocation2 + $0x8] sm:$0xff] %vm46, %v539
    %694 = vst.msk [vmem:[#allocation2 + $0x10] sm:$0xff] %vm46, %v612
    %695 = vst.msk [vmem:[#allocation2 + $0x18] sm:$0xff] %vm46, %v685
    // Predicated region
    $region14: #{tpu_custom_call.1} parent=1 // pred_check
      _
    $region15: #{tpu_custom_call.1} parent=1 // pred_check_branch
      %697 = sbr.rel (0) target = $region17
    $region16: #{tpu_custom_call.1} parent=1 // pred_region
      %s699 = ssub.s32 512, 512
      %700 = vsyncadd [#allocation3], %s699
      %s701 = sshll.u32 [#allocation2], 4
      %s702 = int_to_ptr.vmem [resolvable:$true] %s701
      %707 = dma.vmem_to_hbm [thread:$0]  %s702, 512, %s3, [#allocation3], 128, 128, 8
    $region17: #{tpu_custom_call.1} parent=1 // pred_fallthru
      _
    // Predicated region
    $region18: #{tpu_custom_call.1} parent=1 // pred_check
      _
    $region19: #{tpu_custom_call.1} parent=1 // pred_check_branch
      %709 = sbr.rel (0) target = $region21
    $region20: #{tpu_custom_call.1} parent=1 // pred_region
      %s711 = ssub.s32 512, 512
      %712 = vsyncadd [#allocation5], %s711
      %s713 = sshll.u32 [#allocation4], 4
      %s714 = int_to_ptr.vmem [resolvable:$true] %s713
      %719 = dma.vmem_to_hbm [thread:$0]  %s714, 512, %s4, [#allocation5], 128, 128, 8
    $region21: #{tpu_custom_call.1} parent=1 // pred_fallthru
      _
    // Predicated region
    $region22: #{tpu_custom_call.1} parent=1 // pred_check
      _
    $region23: #{tpu_custom_call.1} parent=1 // pred_check_branch
      %721 = sbr.rel (0) target = $region25
    $region24: #{tpu_custom_call.1} parent=1 // pred_region
      %722 = dma.done [#allocation3], 512
    $region25: #{tpu_custom_call.1} parent=1 // pred_fallthru
      _
    // Predicated region
    $region26: #{tpu_custom_call.1} parent=1 // pred_check
      _
    $region27: #{tpu_custom_call.1} parent=1 // pred_check_branch
      %724 = sbr.rel (0) target = $region29
    $region28: #{tpu_custom_call.1} parent=1 // pred_region
      %725 = dma.done [#allocation5], 512
    $region29: #{tpu_custom_call.1} parent=1 // pred_fallthru
      _
    %726 = vsyncpa [#allocation3], 1
    %727 = vsyncpa [#allocation5], 1

</llo_original>
